<compile_context>
chip_gen: v7x
topology: tpu7x:2x2x1
jax: 0.10.0
libtpu: 0.0.40
codegen_flags: <defaults>
</compile_context>

<pallas_src>
import functools

import jax
import jax.numpy as jnp
from jax.experimental import pallas as pl
from jax.experimental.pallas import tpu as pltpu


def _round_up(v, m):
    return (v + m - 1) // m * m


# --------------------------------------------------------------------------
# Kernel body
# --------------------------------------------------------------------------
def _graph_conv_kernel(*refs, add_self, normalize, use_bias, swap_order,
                       mxu_dtype):
    idx = 0
    adj_ref = refs[idx]; idx += 1
    x_ref = refs[idx]; idx += 1
    w_ref = refs[idx]; idx += 1
    b_ref = None
    if use_bias:
        b_ref = refs[idx]; idx += 1
    o_ref = refs[idx]; idx += 1
    xw_ref = refs[idx] if swap_order else None

    f32 = jnp.float32
    bb, tm, _ = adj_ref.shape          # (Bb, tm, N_pad)
    _, n_pad, din = x_ref.shape        # (Bb, N_pad, Din)
    d_pad = o_ref.shape[-1]            # Dout (possibly padded to 128)

    row_start = pl.multiple_of(pl.program_id(1) * tm, tm)

    if swap_order:
        # y = adj @ (x @ W) (+ x @ W).  Cache x @ W once per batch block,
        # already in the MXU dtype, so it is neither recomputed nor recast
        # for every row tile.  (adj@x + x)@W == adj@(x@W) + x@W exactly in
        # real arithmetic; rounding order differs from the reference at
        # tolerance level.
        @pl.when(pl.program_id(1) == 0)
        def _():
            x2d = x_ref[...].astype(mxu_dtype).reshape(bb * n_pad, din)
            w = w_ref[...].astype(mxu_dtype)
            xw_ref[...] = jnp.dot(
                x2d, w, preferred_element_type=f32
            ).reshape(bb, n_pad, d_pad).astype(xw_ref.dtype)

        adj = adj_ref[...].astype(mxu_dtype)               # (Bb, tm, Npad)
        y = jnp.einsum("brn,bnf->brf", adj, xw_ref[...],
                       preferred_element_type=f32)
        if add_self:
            y = y + xw_ref[:, pl.ds(row_start, tm), :].astype(f32)
    else:
        adj = adj_ref[...].astype(mxu_dtype)               # (Bb, tm, Npad)
        xx = x_ref[...].astype(mxu_dtype)                  # (Bb, Npad, Din)
        y = jnp.einsum("brn,bnd->brd", adj, xx, preferred_element_type=f32)
        if add_self:
            y = y + x_ref[:, pl.ds(row_start, tm), :].astype(f32)
        w = w_ref[...].astype(mxu_dtype)
        y2d = y.reshape(bb * tm, din).astype(mxu_dtype)
        y = jnp.dot(y2d, w, preferred_element_type=f32).reshape(bb, tm, d_pad)

    if use_bias:
        y = y + b_ref[...].astype(f32).reshape(1, 1, d_pad)

    if normalize:
        # F.normalize(p=2, dim=2, eps=1e-12):
        #   y / max(||y||, eps) == y * rsqrt(max(||y||^2, eps^2))
        ssq = jnp.sum(y * y, axis=-1, keepdims=True)
        y = y * jax.lax.rsqrt(jnp.maximum(ssq, 1e-24))

    o_ref[...] = y.astype(o_ref.dtype)


# --------------------------------------------------------------------------
# VMEM model & tile selection (generation-aware)
# --------------------------------------------------------------------------
def _chip_info():
    """(vmem_capacity_bytes, mxu_rows, is_v5, two_tensorcores)."""
    vmem_cap = 128 * 1024 * 1024
    try:
        info = pltpu.get_tpu_info()
        vmem_cap = int(getattr(info, "vmem_capacity_bytes", vmem_cap))
    except Exception:
        pass
    kind = ""
    try:
        kind = jax.devices()[0].device_kind.lower()
    except Exception:
        pass
    is_v5 = "v5" in kind
    # v7x: two TensorCores per chip, 64 MiB VMEM per TC.
    two_tc = ("7" in kind) or (vmem_cap <= 80 * 1024 * 1024)
    mxu_rows = 128 if is_v5 else 256
    return vmem_cap, mxu_rows, is_v5, two_tc


def _vmem_bytes(bb, tm, n_pad, din, d_pad, adj_bytes, x_bytes, w_bytes,
                out_bytes, sc_bytes, swap, adj_buffers, resident_buffers):
    adj_b = adj_buffers * bb * tm * n_pad * adj_bytes        # streamed adj tile
    x_b = resident_buffers * bb * n_pad * din * x_bytes      # resident x
    w_b = resident_buffers * din * d_pad * w_bytes           # resident weight
    b_b = resident_buffers * d_pad * 4                       # bias (if any)
    o_b = 2 * bb * tm * d_pad * out_bytes                    # out tile (2-buf)
    sc = bb * n_pad * d_pad * sc_bytes if swap else 0        # x @ W cache
    tmp = 4 * bb * tm * max(din, d_pad) * 4                  # f32 intermediates
    return adj_b + x_b + w_b + b_b + o_b + sc + tmp


def _tm_candidates(n8, mxu_rows):
    cands = []
    if n8 <= 2048:
        cands.append(n8)
    for t in (2048, 1792, 1536, 1280, 1024, 768, 512, 384, 256, 128):
        if t < n8 and t % mxu_rows == 0 and t not in cands:
            cands.append(t)
    for t in (128, 64, 32, 16, 8):       # last resort: poor MXU fill
        if t < n8 and t not in cands:
            cands.append(t)
    return cands


def _choose_tiles(batch, n8, din, d_pad, adj_bytes, x_bytes, w_bytes,
                  out_bytes, sc_bytes, swap, row_block, budget, adj_buffers,
                  resident_buffers, mxu_rows, two_tc):
    bb_max = batch
    if two_tc and batch >= 2:
        bb_max = max(1, batch // 2)      # keep >= 2 parallel steps for 2 TCs
    batch_cap = max(1, 512 // n8)        # pack small graphs per grid step
    bb_cands = [d for d in range(min(bb_max, batch_cap), 0, -1)
                if batch % d == 0] or [1]
    if row_block is not None:
        tm_cands = [min(_round_up(row_block, 8), n8)]
    else:
        tm_cands = _tm_candidates(n8, mxu_rows)
    for tm in tm_cands:                  # tm-major: prioritise MXU fill
        for bb in bb_cands:
            need = _vmem_bytes(bb, tm, _round_up(n8, tm), din, d_pad,
                               adj_bytes, x_bytes, w_bytes, out_bytes,
                               sc_bytes, swap, adj_buffers, resident_buffers)
            if need <= budget:
                return bb, tm, True
    # Nothing fits: smallest batch + MXU-friendly row tile; caller raises
    # vmem_limit toward the physical cap.
    # TODO(synk): add a contraction-(N)/feature-(Dout) tiling grid axis so the
    # resident x / W blocks need not fit in VMEM for very large graphs.
    return 1, min(n8, mxu_rows), False


# --------------------------------------------------------------------------
# Wrapper
# --------------------------------------------------------------------------
def graph_conv(x, adj, weight, bias=None, *, add_self=False,
               normalize_embedding=False, matmul_order="auto",
               mxu_precision="auto", row_block=None, lane_pad_output=None):
    """GraphConv forward.  x: (B, N, Din), adj: (B, N, N), weight: (Din, Dout)."""
    B, N, Din = x.shape
    Dout = weight.shape[1]
    use_bias = bias is not None
    out_dtype = x.dtype

    vmem_cap, mxu_rows, is_v5, two_tc = _chip_info()
    budget = int(vmem_cap * 0.70)            # ~90 MiB on v5e/v6e, ~45 MiB v7x
    vmem_limit_cap = int(vmem_cap * 0.84)    # ~107 MiB / ~54 MiB

    # Output feature padding: lane-dense (128-multiple) stores by default;
    # for large outputs where padding inflates write traffic > 1.25x, store the
    # true Dout with masked vst instead (avoids the extra XLA slice copy).
    dout128 = _round_up(Dout, 128)
    if lane_pad_output is None:
        out_hbm_bytes = B * N * Dout * jnp.dtype(out_dtype).itemsize
        lane_pad_output = not (Dout % 128 != 0
                               and out_hbm_bytes >= (4 << 20)
                               and dout128 * 4 > Dout * 5)
    Dout_pad = dout128 if lane_pad_output else Dout
    N8 = _round_up(N, 8)

    if matmul_order == "auto":
        swap_order = Dout_pad < Din          # cheaper N x N contraction width
    elif matmul_order == "xw_first":
        swap_order = True
    else:                                    # "adj_first"
        swap_order = False

    # MXU operand dtype: "auto" keeps f32 for f32 inputs (matches reference);
    # "bf16" is an opt-in that halves the dominant adj HBM stream.
    all_bf16 = (x.dtype == jnp.bfloat16 and adj.dtype == jnp.bfloat16
                and weight.dtype == jnp.bfloat16)
    if mxu_precision == "bf16":
        mxu_dtype = jnp.bfloat16
    elif mxu_precision == "f32":
        mxu_dtype = jnp.float32
    else:
        mxu_dtype = jnp.bfloat16 if all_bf16 else jnp.float32

    adj_bytes = adj.dtype.itemsize
    x_bytes = x.dtype.itemsize
    w_bytes = weight.dtype.itemsize
    out_bytes = jnp.dtype(out_dtype).itemsize
    sc_bytes = jnp.dtype(mxu_dtype).itemsize

    # On v5e the adj DMA is long relative to MXU work: use a 3-deep buffer.
    adj_buffers = 3 if is_v5 else 2
    Bb, tm, fits = _choose_tiles(B, N8, Din, Dout_pad, adj_bytes, x_bytes,
                                 w_bytes, out_bytes, sc_bytes, swap_order,
                                 row_block, budget, adj_buffers, 1, mxu_rows,
                                 two_tc)
    if not fits and adj_buffers != 2:
        adj_buffers = 2
        Bb, tm, fits = _choose_tiles(B, N8, Din, Dout_pad, adj_bytes, x_bytes,
                                     w_bytes, out_bytes, sc_bytes, swap_order,
                                     row_block, budget, adj_buffers, 1,
                                     mxu_rows, two_tc)
    N_pad = _round_up(N, tm)

    # Zero padding is inert: padded adj rows/cols and x rows contribute nothing
    # to real outputs; padded output rows/cols are sliced off below.
    adj_p, x_p = adj, x
    if N_pad != N:
        adj_p = jnp.pad(adj, ((0, 0), (0, N_pad - N), (0, N_pad - N)))
        x_p = jnp.pad(x, ((0, 0), (0, N_pad - N), (0, 0)))
    w_p = weight if Dout_pad == Dout else jnp.pad(
        weight, ((0, 0), (0, Dout_pad - Dout)))
    bias2d = None
    if use_bias:
        bias2d = bias.reshape(1, Dout)
        if Dout_pad != Dout:
            bias2d = jnp.pad(bias2d, ((0, 0), (0, Dout_pad - Dout)))

    vmem_need = _vmem_bytes(Bb, tm, N_pad, Din, Dout_pad, adj_bytes, x_bytes,
                            w_bytes, out_bytes, sc_bytes, swap_order,
                            adj_buffers, 1)
    if fits:
        vmem_limit = int(min(vmem_limit_cap,
                             max(32 * 1024 * 1024, int(vmem_need * 1.6))))
    else:
        vmem_limit = vmem_limit_cap

    kernel = functools.partial(
        _graph_conv_kernel,
        add_self=add_self,
        normalize=normalize_embedding,
        use_bias=use_bias,
        swap_order=swap_order,
        mxu_dtype=mxu_dtype,
    )

    scratch_shapes = []
    if swap_order:
        # x @ W cache held in the MXU dtype (bf16 halves this allocation when
        # the bf16 path is active).
        scratch_shapes.append(pltpu.VMEM((Bb, N_pad, Dout_pad), mxu_dtype))

    # x@W cache carries state across row tiles -> that axis must be sequential.
    dim_sem = (("parallel", "arbitrary") if swap_order
               else ("parallel", "parallel"))

    def _run(use_pipeline_modes):
        # x / W / bias are resident across the row axis: single-buffer them
        # (index maps constant along that axis, so double-buffering buys no
        # overlap and just doubles their VMEM footprint).
        resident_mode = ({"pipeline_mode": pl.Buffered(1)}
                         if use_pipeline_modes else {})
        adj_mode = ({"pipeline_mode": pl.Buffered(adj_buffers)}
                    if (use_pipeline_modes and adj_buffers != 2) else {})

        in_specs = [
            pl.BlockSpec((Bb, tm, N_pad), lambda b, r: (b, r, 0), **adj_mode),
            pl.BlockSpec((Bb, N_pad, Din), lambda b, r: (b, 0, 0),
                         **resident_mode),
            pl.BlockSpec((Din, Dout_pad), lambda b, r: (0, 0),
                         **resident_mode),
        ]
        operands = [adj_p, x_p, w_p]
        if use_bias:
            in_specs.append(pl.BlockSpec((1, Dout_pad), lambda b, r: (0, 0),
                                         **resident_mode))
            operands.append(bias2d)

        return pl.pallas_call(
            kernel,
            out_shape=jax.ShapeDtypeStruct((B, N_pad, Dout_pad), out_dtype),
            grid_spec=pltpu.PrefetchScalarGridSpec(
                num_scalar_prefetch=0,
                grid=(B // Bb, N_pad // tm),
                in_specs=in_specs,
                out_specs=pl.BlockSpec((Bb, tm, Dout_pad),
                                       lambda b, r: (b, r, 0)),
                scratch_shapes=scratch_shapes,
            ),
            compiler_params=pltpu.CompilerParams(
                dimension_semantics=dim_sem,
                vmem_limit_bytes=vmem_limit,
            ),
        )(*operands)

    try:
        out = _run(True)
    except Exception:
        # Defensive fallback: identical semantics with default (2-deep)
        # buffering if the pipeline_mode request is rejected by this runtime.
        out = _run(False)

    if N_pad != N or Dout_pad != Dout:
        out = out[:, :N, :Dout]
    return out


def graph_conv_ref(x, adj, weight, bias=None, *, add_self=False,
                   normalize_embedding=False):
    """Pure-JAX reference for correctness checking."""
    y = jnp.matmul(adj, x)
    if add_self:
        y = y + x
    y = jnp.matmul(y, weight)
    if bias is not None:
        y = y + bias
    if normalize_embedding:
        norm = jnp.sqrt(jnp.sum(y * y, axis=2, keepdims=True))
        y = y / jnp.maximum(norm, 1e-12)
    return y


if __name__ == "__main__":
    # TODO(synk): dropout (train-mode random masking) not implemented; this is
    # the inference / dropout=0.0 path, matching the module defaults.
    key = jax.random.PRNGKey(0)

    def make_inputs(B, N, Din, Dout):
        kx, kadj, kw, kb = jax.random.split(
            jax.random.fold_in(key, N * 1000 + Din), 4)
        xi = jax.random.normal(kx, (B, N, Din), dtype=jnp.float32)
        ai = jax.random.uniform(kadj, (B, N, N), dtype=jnp.float32)
        wi = jax.random.normal(kw, (Din, Dout), dtype=jnp.float32) * 0.1
        bi = jax.random.normal(kb, (Dout,), dtype=jnp.float32) * 0.1
        return xi, ai, wi, bi

    def check(name, xi, ai, wi, bi, *, add_self, normalize_embedding,
              atol=1e-3, rtol=1e-3, **kw):
        out = jax.block_until_ready(
            graph_conv(xi, ai, wi, bi, add_self=add_self,
                       normalize_embedding=normalize_embedding, **kw))
        ref = graph_conv_ref(xi, ai, wi, bi, add_self=add_self,
                             normalize_embedding=normalize_embedding)
        assert out.shape == ref.shape, (name, out.shape, ref.shape)
        err = float(jnp.max(jnp.abs(out - ref)))
        assert jnp.allclose(out, ref, atol=atol, rtol=rtol), (name, err)

    # Module-implied shapes: batch=2, nodes=8, input_dim=32, output_dim=64.
    x, adj, w, b = make_inputs(2, 8, 32, 64)
    check("base", x, adj, w, b, add_self=False, normalize_embedding=False)
    check("self_norm", x, adj, w, b, add_self=True, normalize_embedding=True)
    # No-bias + swapped matmul order (x @ W cached in a VMEM scratch).
    check("xw_first", x, adj, w, None, add_self=True, normalize_embedding=True,
          matmul_order="xw_first")
    # Opt-in bf16 MXU operands (deviates from f32 ref at bf16 tolerance).
    check("bf16_mxu", x, adj, w, b, add_self=True, normalize_embedding=True,
          mxu_precision="bf16", atol=5e-2, rtol=5e-2)
    # Row-tiled + padded (N not a multiple of the row tile) paths.
    x2, adj2, w2, b2 = make_inputs(2, 20, 48, 64)
    check("row_tiled", x2, adj2, w2, b2, add_self=True,
          normalize_embedding=True, row_block=8)
    check("row_tiled_xw", x2, adj2, w2, b2, add_self=True,
          normalize_embedding=False, row_block=8, matmul_order="xw_first")
    # Masked-store (unpadded Dout) output path.
    check("masked_out", x2, adj2, w2, b2, add_self=False,
          normalize_embedding=True, lane_pad_output=False)

    print("KERNEL_OK")
</pallas_src>

<mosaic_0001>
module attributes {stable_mosaic.version = 11 : i64} {
  func.func @_graph_conv_kernel(%arg0: i32, %arg1: i32, %arg2: memref<2x8x8xf32, #tpu.memory_space<vmem>>, %arg3: memref<2x8x32xf32, #tpu.memory_space<vmem>>, %arg4: memref<32x128xf32, #tpu.memory_space<vmem>>, %arg5: memref<1x128xf32, #tpu.memory_space<vmem>>, %arg6: memref<2x8x128xf32, #tpu.memory_space<vmem>>) attributes {dimension_semantics = [#tpu.dimension_semantics<parallel>, #tpu.dimension_semantics<parallel>], iteration_bounds = array<i64: 1, 1>, scalar_prefetch = 0 : i64, scratch_operands = 0 : i64, tpu.core_type = #tpu.core_type<tc>, window_params = [{transform_indices = @transform_0, window_bounds = array<i64: 2, 8, 8>}, {pipeline_mode = #tpu.pipeline_mode<synchronous>, transform_indices = @transform_1, window_bounds = array<i64: 2, 8, 32>}, {pipeline_mode = #tpu.pipeline_mode<synchronous>, transform_indices = @transform_2, window_bounds = array<i64: 32, 128>}, {pipeline_mode = #tpu.pipeline_mode<synchronous>, transform_indices = @transform_3, window_bounds = array<i64: 1, 128>}, {transform_indices = @transform_4, window_bounds = array<i64: 2, 8, 128>}]} {
    %c0 = arith.constant 0 : index
    %c0_0 = arith.constant 0 : index
    %c0_1 = arith.constant 0 : index
    %0 = vector.load %arg2[%c0, %c0_0, %c0_1] : memref<2x8x8xf32, #tpu.memory_space<vmem>>, vector<2x8x8xf32>
    %c0_2 = arith.constant 0 : index
    %c0_3 = arith.constant 0 : index
    %c0_4 = arith.constant 0 : index
    %1 = vector.load %arg3[%c0_2, %c0_3, %c0_4] : memref<2x8x32xf32, #tpu.memory_space<vmem>>, vector<2x8x32xf32>
    "tpu.trace_start"() <{level = 10 : i32, message = "brn,bnd->brd"}> : () -> ()
    %cst = arith.constant dense<0.000000e+00> : vector<2x8x32xf32>
    %2 = tpu.matmul %0, %1, %cst {dimension_numbers = #tpu.dot_dimension_numbers<[2], [1], [1], [2], [0, 0, 0, 1, 1, 2], [0], [0]>} : vector<2x8x8xf32>, vector<2x8x32xf32>, vector<2x8x32xf32> -> vector<2x8x32xf32>
    "tpu.trace_stop"() : () -> ()
    %c0_5 = arith.constant 0 : index
    %c0_6 = arith.constant 0 : index
    %3 = vector.load %arg4[%c0_5, %c0_6] : memref<32x128xf32, #tpu.memory_space<vmem>>, vector<32x128xf32>
    %4 = vector.shape_cast %2 : vector<2x8x32xf32> to vector<16x32xf32>
    %cst_7 = arith.constant dense<0.000000e+00> : vector<16x128xf32>
    %5 = tpu.matmul %4, %3, %cst_7 {dimension_numbers = #tpu.dot_dimension_numbers<[1], [0], [0], [1], [0, 0, 1, 1], [], []>} : vector<16x32xf32>, vector<32x128xf32>, vector<16x128xf32> -> vector<16x128xf32>
    %6 = vector.shape_cast %5 : vector<16x128xf32> to vector<2x8x128xf32>
    %c0_8 = arith.constant 0 : index
    %c0_9 = arith.constant 0 : index
    %7 = vector.load %arg5[%c0_8, %c0_9] : memref<1x128xf32, #tpu.memory_space<vmem>>, vector<1x128xf32>
    %8 = vector.shape_cast %7 : vector<1x128xf32> to vector<1x1x128xf32>
    %9 = vector.broadcast %8 : vector<1x1x128xf32> to vector<2x8x128xf32>
    %10 = arith.addf %6, %9 : vector<2x8x128xf32>
    %c0_10 = arith.constant 0 : index
    %c0_11 = arith.constant 0 : index
    %c0_12 = arith.constant 0 : index
    %11 = vector.load %arg6[%c0_10, %c0_11, %c0_12] : memref<2x8x128xf32, #tpu.memory_space<vmem>>, vector<2x8x128xf32>
    tpu.vector_store %arg6[%c0_10, %c0_11, %c0_12], %10 {strides = array<i32>} : memref<2x8x128xf32, #tpu.memory_space<vmem>>, vector<2x8x128xf32>,
    return
  }
  func.func @transform_0(%arg0: i32, %arg1: i32) -> (i32, i32, i32) {
    %c0_i32 = arith.constant 0 : i32
    %c0_i32_0 = arith.constant 0 : i32
    return %arg0, %arg1, %c0_i32 : i32, i32, i32
  }
  func.func @transform_1(%arg0: i32, %arg1: i32) -> (i32, i32, i32) {
    %c0_i32 = arith.constant 0 : i32
    %c0_i32_0 = arith.constant 0 : i32
    %c0_i32_1 = arith.constant 0 : i32
    return %arg0, %c0_i32, %c0_i32_0 : i32, i32, i32
  }
  func.func @transform_2(%arg0: i32, %arg1: i32) -> (i32, i32) {
    %c0_i32 = arith.constant 0 : i32
    %c0_i32_0 = arith.constant 0 : i32
    %c0_i32_1 = arith.constant 0 : i32
    return %c0_i32, %c0_i32_0 : i32, i32
  }
  func.func @transform_3(%arg0: i32, %arg1: i32) -> (i32, i32) {
    %c0_i32 = arith.constant 0 : i32
    %c0_i32_0 = arith.constant 0 : i32
    %c0_i32_1 = arith.constant 0 : i32
    return %c0_i32, %c0_i32_0 : i32, i32
  }
  func.func @transform_4(%arg0: i32, %arg1: i32) -> (i32, i32, i32) {
    %c0_i32 = arith.constant 0 : i32
    %c0_i32_0 = arith.constant 0 : i32
    return %arg0, %arg1, %c0_i32 : i32, i32, i32
  }
}

module attributes {stable_mosaic.version = 11 : i64} {
  func.func @_graph_conv_kernel(%arg0: i32, %arg1: i32, %arg2: memref<2x8x8xf32, #tpu.memory_space<vmem>>, %arg3: memref<2x8x32xf32, #tpu.memory_space<vmem>>, %arg4: memref<32x128xf32, #tpu.memory_space<vmem>>, %arg5: memref<1x128xf32, #tpu.memory_space<vmem>>, %arg6: memref<2x8x128xf32, #tpu.memory_space<vmem>>) attributes {dimension_semantics = [#tpu.dimension_semantics<parallel>, #tpu.dimension_semantics<parallel>], iteration_bounds = array<i64: 1, 1>, scalar_prefetch = 0 : i64, scratch_operands = 0 : i64, tpu.core_type = #tpu.core_type<tc>, window_params = [{transform_indices = @transform_0, window_bounds = array<i64: 2, 8, 8>}, {transform_indices = @transform_1, window_bounds = array<i64: 2, 8, 32>}, {pipeline_mode = #tpu.pipeline_mode<synchronous>, transform_indices = @transform_2, window_bounds = array<i64: 32, 128>}, {pipeline_mode = #tpu.pipeline_mode<synchronous>, transform_indices = @transform_3, window_bounds = array<i64: 1, 128>}, {transform_indices = @transform_4, window_bounds = array<i64: 2, 8, 128>}]} {
    %c0 = arith.constant 0 : index
    %c0_0 = arith.constant 0 : index
    %c0_1 = arith.constant 0 : index
    %0 = vector.load %arg2[%c0, %c0_0, %c0_1] : memref<2x8x8xf32, #tpu.memory_space<vmem>>, vector<2x8x8xf32>
    %c0_2 = arith.constant 0 : index
    %c0_3 = arith.constant 0 : index
    %c0_4 = arith.constant 0 : index
    %1 = vector.load %arg3[%c0_2, %c0_3, %c0_4] : memref<2x8x32xf32, #tpu.memory_space<vmem>>, vector<2x8x32xf32>
    "tpu.trace_start"() <{level = 10 : i32, message = "brn,bnd->brd"}> : () -> ()
    %cst = arith.constant dense<0.000000e+00> : vector<2x8x32xf32>
    %2 = tpu.matmul %0, %1, %cst {dimension_numbers = #tpu.dot_dimension_numbers<[2], [1], [1], [2], [0, 0, 0, 1, 1, 2], [0], [0]>} : vector<2x8x8xf32>, vector<2x8x32xf32>, vector<2x8x32xf32> -> vector<2x8x32xf32>
    "tpu.trace_stop"() : () -> ()
    %c0_5 = arith.constant 0 : index
    %c0_6 = arith.constant 0 : index
    %3 = vector.load %arg4[%c0_5, %c0_6] : memref<32x128xf32, #tpu.memory_space<vmem>>, vector<32x128xf32>
    %4 = vector.shape_cast %2 : vector<2x8x32xf32> to vector<16x32xf32>
    %cst_7 = arith.constant dense<0.000000e+00> : vector<16x128xf32>
    %5 = tpu.matmul %4, %3, %cst_7 {dimension_numbers = #tpu.dot_dimension_numbers<[1], [0], [0], [1], [0, 0, 1, 1], [], []>} : vector<16x32xf32>, vector<32x128xf32>, vector<16x128xf32> -> vector<16x128xf32>
    %6 = vector.shape_cast %5 : vector<16x128xf32> to vector<2x8x128xf32>
    %c0_8 = arith.constant 0 : index
    %c0_9 = arith.constant 0 : index
    %7 = vector.load %arg5[%c0_8, %c0_9] : memref<1x128xf32, #tpu.memory_space<vmem>>, vector<1x128xf32>
    %8 = vector.shape_cast %7 : vector<1x128xf32> to vector<1x1x128xf32>
    %9 = vector.broadcast %8 : vector<1x1x128xf32> to vector<2x8x128xf32>
    %10 = arith.addf %6, %9 : vector<2x8x128xf32>
    %c0_10 = arith.constant 0 : index
    %c0_11 = arith.constant 0 : index
    %c0_12 = arith.constant 0 : index
    %11 = vector.load %arg6[%c0_10, %c0_11, %c0_12] : memref<2x8x128xf32, #tpu.memory_space<vmem>>, vector<2x8x128xf32>
    tpu.vector_store %arg6[%c0_10, %c0_11, %c0_12], %10 {strides = array<i32>} : memref<2x8x128xf32, #tpu.memory_space<vmem>>, vector<2x8x128xf32>,
    return
  }
  func.func @transform_0(%arg0: i32, %arg1: i32) -> (i32, i32, i32) {
    %c0_i32 = arith.constant 0 : i32
    %c0_i32_0 = arith.constant 0 : i32
    return %arg0, %arg1, %c0_i32 : i32, i32, i32
  }
  func.func @transform_1(%arg0: i32, %arg1: i32) -> (i32, i32, i32) {
    %c0_i32 = arith.constant 0 : i32
    %c0_i32_0 = arith.constant 0 : i32
    %c0_i32_1 = arith.constant 0 : i32
    return %arg0, %c0_i32, %c0_i32_0 : i32, i32, i32
  }
  func.func @transform_2(%arg0: i32, %arg1: i32) -> (i32, i32) {
    %c0_i32 = arith.constant 0 : i32
    %c0_i32_0 = arith.constant 0 : i32
    %c0_i32_1 = arith.constant 0 : i32
    return %c0_i32, %c0_i32_0 : i32, i32
  }
  func.func @transform_3(%arg0: i32, %arg1: i32) -> (i32, i32) {
    %c0_i32 = arith.constant 0 : i32
    %c0_i32_0 = arith.constant 0 : i32
    %c0_i32_1 = arith.constant 0 : i32
    return %c0_i32, %c0_i32_0 : i32, i32
  }
  func.func @transform_4(%arg0: i32, %arg1: i32) -> (i32, i32, i32) {
    %c0_i32 = arith.constant 0 : i32
    %c0_i32_0 = arith.constant 0 : i32
    return %arg0, %arg1, %c0_i32 : i32, i32, i32
  }
}

</mosaic_0001>

<llo_original>
// kernel: tpu_custom_call.1
$region0: #{tpu_custom_call.1}
  #allocation0 [shape = 'u32[]', space=smem, size = 0x4, offset = 0x4, fixed_abs, tag = 'smem constant byte address 0x4 - core index']
  #allocation1 [shape = 'u32[144,128]{1,0:T(1,128)}', space=vmem, size = 0x12000, scoped, tag = 'internal scratch']
  %s0 = inlined_call_operand.hbm [shape: f32[2,8,8], index: 0, kind: input, shape index: {}]
  %s1 = inlined_call_operand.hbm [shape: f32[2,8,32], index: 1, kind: input, shape index: {}]
  %s2 = inlined_call_operand.hbm [shape: f32[32,128], index: 2, kind: input, shape index: {}]
  %s3 = inlined_call_operand.vmem [shape: f32[1,128], index: 3, kind: input, shape index: {}]
  %s4 = inlined_call_operand.hbm [shape: f32[2,8,128], index: 4, kind: output, shape index: {}]
  %s5 = sld [smem:[#allocation0]]
  $region38: #{tpu_custom_call.1} parent=0
    _
  %s7 = ssub.s32 1, %s5
  %s8 = scalar_select 0, %s7, %s5
  $region1: #{tpu_custom_call.1} parent=0
    #allocation2 [shape = 'u8[8192]{0}', space=vmem, size = 0x2000, scoped, tag = 'input window, operand 0, single buffered']
    #allocation3 [shape = 's32[1]{0}', space=sflag, size = 0x4, scoped, tag = 'scoped memory for tpu_custom_call.1']
    #allocation4 [shape = 's32[1]{0}', space=sflag, size = 0x4, scoped, tag = 'scoped memory for tpu_custom_call.1']
    #allocation5 [shape = 'u8[8192]{0}', space=vmem, size = 0x2000, scoped, tag = 'input window, operand 1, single buffered']
    #allocation6 [shape = 's32[1]{0}', space=sflag, size = 0x4, scoped, tag = 'scoped memory for tpu_custom_call.1']
    #allocation7 [shape = 'u8[16384]{0}', space=vmem, size = 0x4000, scoped, tag = 'input window, operand 2, single buffered']
    #allocation8 [shape = 'u8[8192]{0}', space=vmem, size = 0x2000, scoped, tag = 'output window, operand 0, single buffered']
    %9 = vsyncpa [#allocation3], 0
    %10 = vsyncpa [#allocation6], 0
    %11 = vsyncpa [#allocation4], 0
    // Predicated region
    $region2: #{tpu_custom_call.1} parent=1 // pred_check
      _
    $region3: #{tpu_custom_call.1} parent=1 // pred_check_branch
      %13 = sbr.rel (0) target = $region5
    $region4: #{tpu_custom_call.1} parent=1 // pred_region
      %s15 = ssub.s32 256, 256
      %16 = vsyncadd [#allocation3], %s15
      %s17 = sshll.u32 [#allocation2], 4
      %s18 = int_to_ptr.vmem [resolvable:$true] %s17
      %23 = dma.hbm_to_vmem [thread:$0]  %s0, 256, %s18, [#allocation3], 128, 128, 8
    $region5: #{tpu_custom_call.1} parent=1 // pred_fallthru
      _
    // Predicated region
    $region6: #{tpu_custom_call.1} parent=1 // pred_check
      _
    $region7: #{tpu_custom_call.1} parent=1 // pred_check_branch
      %25 = sbr.rel (0) target = $region9
    $region8: #{tpu_custom_call.1} parent=1 // pred_region
      %s27 = ssub.s32 256, 256
      %28 = vsyncadd [#allocation6], %s27
      %s29 = sshll.u32 [#allocation5], 4
      %s30 = int_to_ptr.vmem [resolvable:$true] %s29
      %35 = dma.hbm_to_vmem [thread:$0]  %s1, 256, %s30, [#allocation6], 128, 128, 8
    $region9: #{tpu_custom_call.1} parent=1 // pred_fallthru
      _
    // Predicated region
    $region10: #{tpu_custom_call.1} parent=1 // pred_check
      _
    $region11: #{tpu_custom_call.1} parent=1 // pred_check_branch
      %37 = sbr.rel (0) target = $region13
    $region12: #{tpu_custom_call.1} parent=1 // pred_region
      %s39 = ssub.s32 512, 512
      %40 = vsyncadd [#allocation6], %s39
      %s41 = sshll.u32 [#allocation7], 4
      %s42 = int_to_ptr.vmem [resolvable:$true] %s41
      %47 = dma.hbm_to_vmem [thread:$0]  %s2, 512, %s42, [#allocation6], 128, 128, 8
    $region13: #{tpu_custom_call.1} parent=1 // pred_fallthru
      _
    // Predicated region
    $region14: #{tpu_custom_call.1} parent=1 // pred_check
      _
    $region15: #{tpu_custom_call.1} parent=1 // pred_check_branch
      %49 = sbr.rel (0) target = $region17
    $region16: #{tpu_custom_call.1} parent=1 // pred_region
      _
    $region17: #{tpu_custom_call.1} parent=1 // pred_fallthru
      _
    // Predicated region
    $region18: #{tpu_custom_call.1} parent=1 // pred_check
      _
    $region19: #{tpu_custom_call.1} parent=1 // pred_check_branch
      %51 = sbr.rel (0) target = $region21
    $region20: #{tpu_custom_call.1} parent=1 // pred_region
      %52 = dma.done [#allocation3], 256
    $region21: #{tpu_custom_call.1} parent=1 // pred_fallthru
      _
    // Predicated region
    $region22: #{tpu_custom_call.1} parent=1 // pred_check
      _
    $region23: #{tpu_custom_call.1} parent=1 // pred_check_branch
      %54 = sbr.rel (0) target = $region25
    $region24: #{tpu_custom_call.1} parent=1 // pred_region
      %55 = dma.done [#allocation6], 256
    $region25: #{tpu_custom_call.1} parent=1 // pred_fallthru
      _
    // Predicated region
    $region26: #{tpu_custom_call.1} parent=1 // pred_check
      _
    $region27: #{tpu_custom_call.1} parent=1 // pred_check_branch
      %57 = sbr.rel (0) target = $region29
    $region28: #{tpu_custom_call.1} parent=1 // pred_region
      %58 = dma.done [#allocation6], 512
    $region29: #{tpu_custom_call.1} parent=1 // pred_fallthru
      _
    %v59 = vld [vmem:[#allocation2] sm:$0xff]
    %v60 = vld [vmem:[#allocation2 + $0x8] sm:$0xff]
    %v61 = vld [vmem:[#allocation5] sm:$0xff]
    %v62 = vld [vmem:[#allocation5 + $0x8] sm:$0xff]
    %vm63 = vcmask 64512
    %v65 = vsel %vm63, %v59, 0
    %67 = vmatprep.subr.mxu0 0.0
    %68 = vmatpush1.msra.mxu0 %v61
    %69 = vmatprep.subr.mxu0 0.0
    %70 = vmatpush1.msra.mxu0 0.0
    %71 = vmatprep.subr.mxu0 0.0
    %72 = vmatpush1.msra.mxu0 0.0
    %73 = vmatprep.subr.mxu0 0.0
    %74 = vmatpush1.msra.mxu0 0.0
    %75 = vmatprep.subr.mxu0 0.0
    %76 = vmatpush1.msra.mxu0 0.0
    %77 = vmatprep.subr.mxu0 0.0
    %78 = vmatpush1.msra.mxu0 0.0
    %79 = vmatprep.subr.mxu0 0.0
    %80 = vmatpush1.msra.mxu0 0.0
    %81 = vmatprep.subr.mxu0 0.0
    %82 = vmatpush1.msra.mxu0 0.0
    %83 = vmatprep.subr.mxu0 0.0
    %84 = vmatpush1.msra.mxu0 0.0
    %85 = vmatprep.subr.mxu0 0.0
    %86 = vmatpush1.msra.mxu0 0.0
    %87 = vmatprep.subr.mxu0 0.0
    %88 = vmatpush1.msra.mxu0 0.0
    %89 = vmatprep.subr.mxu0 0.0
    %90 = vmatpush1.msra.mxu0 0.0
    %91 = vmatprep.subr.mxu0 0.0
    %92 = vmatpush1.msra.mxu0 0.0
    %93 = vmatprep.subr.mxu0 0.0
    %94 = vmatpush1.msra.mxu0 0.0
    %95 = vmatprep.subr.mxu0 0.0
    %96 = vmatpush1.msra.mxu0 0.0
    %97 = vmatprep.subr.mxu0 0.0
    %98 = vmatpush1.msra.mxu0 0.0
    %99 = vmatprep.subr.mxu0 0.0
    %100 = vmatpush1.msra.mxu0 0.0
    %101 = vmatprep.subr.mxu0 0.0
    %102 = vmatpush1.msra.mxu0 0.0
    %103 = vmatprep.subr.mxu0 0.0
    %104 = vmatpush1.msra.mxu0 0.0
    %105 = vmatprep.subr.mxu0 0.0
    %106 = vmatpush1.msra.mxu0 0.0
    %107 = vmatprep.subr.mxu0 0.0
    %108 = vmatpush1.msra.mxu0 0.0
    %109 = vmatprep.subr.mxu0 0.0
    %110 = vmatpush1.msra.mxu0 0.0
    %111 = vmatprep.subr.mxu0 0.0
    %112 = vmatpush1.msra.mxu0 0.0
    %113 = vmatprep.subr.mxu0 0.0
    %114 = vmatpush1.msra.mxu0 0.0
    %115 = vmatprep.subr.mxu0 0.0
    %116 = vmatpush1.msra.mxu0 0.0
    %117 = vmatprep.subr.mxu0 0.0
    %118 = vmatpush1.msra.mxu0 0.0
    %119 = vmatprep.subr.mxu0 0.0
    %120 = vmatpush1.msra.mxu0 0.0
    %121 = vmatprep.subr.mxu0 0.0
    %122 = vmatpush1.msra.mxu0 0.0
    %123 = vmatprep.subr.mxu0 0.0
    %124 = vmatpush1.msra.mxu0 0.0
    %125 = vmatprep.subr.mxu0 0.0
    %126 = vmatpush1.msra.mxu0 0.0
    %127 = vmatprep.subr.mxu0 0.0
    %128 = vmatpush1.msra.mxu0 0.0
    %129 = vmatprep.subr.mxu0 0.0
    %130 = vmatpush1.msra.mxu0 0.0
    %131 = vmatprep.mubr.f32.mxu0 0.0
    %132 = vmatmul.mubr.f32.gmra.mrb[0].mxu0 %v65
    %v133 = vpop.f32.mrb[0].mxu0
    %v134 = vadd.f32 0.0, %v133
    %v135 = vpop.f32.mrb[0].mxu0
    %136 = vdwg.mxu0
    %v138 = vsel %vm63, %v60, 0
    %140 = vmatprep.subr.mxu0 0.0
    %141 = vmatpush1.msra.mxu0 %v62
    %142 = vmatprep.subr.mxu0 0.0
    %143 = vmatpush1.msra.mxu0 0.0
    %144 = vmatprep.subr.mxu0 0.0
    %145 = vmatpush1.msra.mxu0 0.0
    %146 = vmatprep.subr.mxu0 0.0
    %147 = vmatpush1.msra.mxu0 0.0
    %148 = vmatprep.subr.mxu0 0.0
    %149 = vmatpush1.msra.mxu0 0.0
    %150 = vmatprep.subr.mxu0 0.0
    %151 = vmatpush1.msra.mxu0 0.0
    %152 = vmatprep.subr.mxu0 0.0
    %153 = vmatpush1.msra.mxu0 0.0
    %154 = vmatprep.subr.mxu0 0.0
    %155 = vmatpush1.msra.mxu0 0.0
    %156 = vmatprep.subr.mxu0 0.0
    %157 = vmatpush1.msra.mxu0 0.0
    %158 = vmatprep.subr.mxu0 0.0
    %159 = vmatpush1.msra.mxu0 0.0
    %160 = vmatprep.subr.mxu0 0.0
    %161 = vmatpush1.msra.mxu0 0.0
    %162 = vmatprep.subr.mxu0 0.0
    %163 = vmatpush1.msra.mxu0 0.0
    %164 = vmatprep.subr.mxu0 0.0
    %165 = vmatpush1.msra.mxu0 0.0
    %166 = vmatprep.subr.mxu0 0.0
    %167 = vmatpush1.msra.mxu0 0.0
    %168 = vmatprep.subr.mxu0 0.0
    %169 = vmatpush1.msra.mxu0 0.0
    %170 = vmatprep.subr.mxu0 0.0
    %171 = vmatpush1.msra.mxu0 0.0
    %172 = vmatprep.subr.mxu0 0.0
    %173 = vmatpush1.msra.mxu0 0.0
    %174 = vmatprep.subr.mxu0 0.0
    %175 = vmatpush1.msra.mxu0 0.0
    %176 = vmatprep.subr.mxu0 0.0
    %177 = vmatpush1.msra.mxu0 0.0
    %178 = vmatprep.subr.mxu0 0.0
    %179 = vmatpush1.msra.mxu0 0.0
    %180 = vmatprep.subr.mxu0 0.0
    %181 = vmatpush1.msra.mxu0 0.0
    %182 = vmatprep.subr.mxu0 0.0
    %183 = vmatpush1.msra.mxu0 0.0
    %184 = vmatprep.subr.mxu0 0.0
    %185 = vmatpush1.msra.mxu0 0.0
    %186 = vmatprep.subr.mxu0 0.0
    %187 = vmatpush1.msra.mxu0 0.0
    %188 = vmatprep.subr.mxu0 0.0
    %189 = vmatpush1.msra.mxu0 0.0
    %190 = vmatprep.subr.mxu0 0.0
    %191 = vmatpush1.msra.mxu0 0.0
    %192 = vmatprep.subr.mxu0 0.0
    %193 = vmatpush1.msra.mxu0 0.0
    %194 = vmatprep.subr.mxu0 0.0
    %195 = vmatpush1.msra.mxu0 0.0
    %196 = vmatprep.subr.mxu0 0.0
    %197 = vmatpush1.msra.mxu0 0.0
    %198 = vmatprep.subr.mxu0 0.0
    %199 = vmatpush1.msra.mxu0 0.0
    %200 = vmatprep.subr.mxu0 0.0
    %201 = vmatpush1.msra.mxu0 0.0
    %202 = vmatprep.subr.mxu0 0.0
    %203 = vmatpush1.msra.mxu0 0.0
    %204 = vmatprep.mubr.f32.mxu0 0.0
    %205 = vmatmul.mubr.f32.gmra.mrb[0].mxu0 %v138
    %v206 = vpop.f32.mrb[0].mxu0
    %v207 = vadd.f32 0.0, %v206
    %v208 = vpop.f32.mrb[0].mxu0
    %209 = vdwg.mxu0
    %v210 = vld [vmem:[#allocation7] sm:$0xff]
    %v211 = vld [vmem:[#allocation7 + $0x8] sm:$0xff]
    %v212 = vld [vmem:[#allocation7 + $0x10] sm:$0xff]
    %v213 = vld [vmem:[#allocation7 + $0x18] sm:$0xff]
    %vm214 = vcmask 261120
    %v216 = vsel %vm214, %v134, 0
    %v219 = vsel %vm214, %v207, 0
    %221 = vmatprep.subr.mxu0 0.0
    %222 = vmatpush1.msra.mxu0 %v210
    %223 = vmatprep.subr.mxu0 0.0
    %224 = vmatpush1.msra.mxu0 %v211
    %225 = vmatprep.subr.mxu0 0.0
    %226 = vmatpush1.msra.mxu0 %v212
    %227 = vmatprep.subr.mxu0 0.0
    %228 = vmatpush1.msra.mxu0 %v213
    %229 = vmatprep.subr.mxu0 0.0
    %230 = vmatpush1.msra.mxu0 0.0
    %231 = vmatprep.subr.mxu0 0.0
    %232 = vmatpush1.msra.mxu0 0.0
    %233 = vmatprep.subr.mxu0 0.0
    %234 = vmatpush1.msra.mxu0 0.0
    %235 = vmatprep.subr.mxu0 0.0
    %236 = vmatpush1.msra.mxu0 0.0
    %237 = vmatprep.subr.mxu0 0.0
    %238 = vmatpush1.msra.mxu0 0.0
    %239 = vmatprep.subr.mxu0 0.0
    %240 = vmatpush1.msra.mxu0 0.0
    %241 = vmatprep.subr.mxu0 0.0
    %242 = vmatpush1.msra.mxu0 0.0
    %243 = vmatprep.subr.mxu0 0.0
    %244 = vmatpush1.msra.mxu0 0.0
    %245 = vmatprep.subr.mxu0 0.0
    %246 = vmatpush1.msra.mxu0 0.0
    %247 = vmatprep.subr.mxu0 0.0
    %248 = vmatpush1.msra.mxu0 0.0
    %249 = vmatprep.subr.mxu0 0.0
    %250 = vmatpush1.msra.mxu0 0.0
    %251 = vmatprep.subr.mxu0 0.0
    %252 = vmatpush1.msra.mxu0 0.0
    %253 = vmatprep.subr.mxu0 0.0
    %254 = vmatpush1.msra.mxu0 0.0
    %255 = vmatprep.subr.mxu0 0.0
    %256 = vmatpush1.msra.mxu0 0.0
    %257 = vmatprep.subr.mxu0 0.0
    %258 = vmatpush1.msra.mxu0 0.0
    %259 = vmatprep.subr.mxu0 0.0
    %260 = vmatpush1.msra.mxu0 0.0
    %261 = vmatprep.subr.mxu0 0.0
    %262 = vmatpush1.msra.mxu0 0.0
    %263 = vmatprep.subr.mxu0 0.0
    %264 = vmatpush1.msra.mxu0 0.0
    %265 = vmatprep.subr.mxu0 0.0
    %266 = vmatpush1.msra.mxu0 0.0
    %267 = vmatprep.subr.mxu0 0.0
    %268 = vmatpush1.msra.mxu0 0.0
    %269 = vmatprep.subr.mxu0 0.0
    %270 = vmatpush1.msra.mxu0 0.0
    %271 = vmatprep.subr.mxu0 0.0
    %272 = vmatpush1.msra.mxu0 0.0
    %273 = vmatprep.subr.mxu0 0.0
    %274 = vmatpush1.msra.mxu0 0.0
    %275 = vmatprep.subr.mxu0 0.0
    %276 = vmatpush1.msra.mxu0 0.0
    %277 = vmatprep.subr.mxu0 0.0
    %278 = vmatpush1.msra.mxu0 0.0
    %279 = vmatprep.subr.mxu0 0.0
    %280 = vmatpush1.msra.mxu0 0.0
    %281 = vmatprep.subr.mxu0 0.0
    %282 = vmatpush1.msra.mxu0 0.0
    %283 = vmatprep.subr.mxu0 0.0
    %284 = vmatpush1.msra.mxu0 0.0
    %285 = vmatprep.mubr.f32.mxu0 0.0
    %286 = vmatmul.mubr.f32.gmra.mrb[0].mxu0 %v216
    %v287 = vpop.f32.mrb[0].mxu0
    %v288 = vadd.f32 0.0, %v287
    %v289 = vpop.f32.mrb[0].mxu0
    %290 = vmatprep.mubr.f32.mxu0 0.0
    %291 = vmatmul.mubr.f32.gmra.mrb[0].mxu0 %v219
    %v292 = vpop.f32.mrb[0].mxu0
    %v293 = vadd.f32 0.0, %v292
    %v294 = vpop.f32.mrb[0].mxu0
    %295 = vdwg.mxu0
    %v296 = vld [vmem:[%s3] sm:$0x1]
    %v298 = vlaneseq
    %v299 = vshrl.u32 %v298, 7
    %v300 = vsub.s32 0, %v299
    %v301 = vrot.slane %v296, %v300
    %v303 = vadd.f32 %v288, %v301
    %v304 = vadd.f32 %v293, %v301
    %305 = vst [vmem:[#allocation8] sm:$0xff] %v303
    %306 = vst [vmem:[#allocation8 + $0x8] sm:$0xff] %v304
    // Predicated region
    $region30: #{tpu_custom_call.1} parent=1 // pred_check
      _
    $region31: #{tpu_custom_call.1} parent=1 // pred_check_branch
      %308 = sbr.rel (0) target = $region33
    $region32: #{tpu_custom_call.1} parent=1 // pred_region
      %s310 = ssub.s32 256, 256
      %311 = vsyncadd [#allocation4], %s310
      %s312 = sshll.u32 [#allocation8], 4
      %s313 = int_to_ptr.vmem [resolvable:$true] %s312
      %318 = dma.vmem_to_hbm [thread:$0]  %s313, 256, %s4, [#allocation4], 128, 128, 8
    $region33: #{tpu_custom_call.1} parent=1 // pred_fallthru
      _
    // Predicated region
    $region34: #{tpu_custom_call.1} parent=1 // pred_check
      _
    $region35: #{tpu_custom_call.1} parent=1 // pred_check_branch
      %320 = sbr.rel (0) target = $region37
    $region36: #{tpu_custom_call.1} parent=1 // pred_region
      %321 = dma.done [#allocation4], 256
    $region37: #{tpu_custom_call.1} parent=1 // pred_fallthru
      _
    %322 = vsyncpa [#allocation3], 1
    %323 = vsyncpa [#allocation6], 1
    %324 = vsyncpa [#allocation4], 1

// kernel: tpu_custom_call.1
$region0: #{tpu_custom_call.1}
  #allocation0 [shape = 'u32[]', space=smem, size = 0x4, offset = 0x4, fixed_abs, tag = 'smem constant byte address 0x4 - core index']
  #allocation1 [shape = 'u32[144,128]{1,0:T(1,128)}', space=vmem, size = 0x12000, scoped, tag = 'internal scratch']
  %s0 = inlined_call_operand.hbm [shape: f32[2,8,8], index: 0, kind: input, shape index: {}]
  %s1 = inlined_call_operand.hbm [shape: f32[2,8,32], index: 1, kind: input, shape index: {}]
  %s2 = inlined_call_operand.hbm [shape: f32[32,128], index: 2, kind: input, shape index: {}]
  %s3 = inlined_call_operand.vmem [shape: f32[1,128], index: 3, kind: input, shape index: {}]
  %s4 = inlined_call_operand.hbm [shape: f32[2,8,128], index: 4, kind: output, shape index: {}]
  %s5 = sld [smem:[#allocation0]]
  $region38: #{tpu_custom_call.1} parent=0
    _
  %s7 = ssub.s32 1, %s5
  %s8 = scalar_select 0, %s7, %s5
  $region1: #{tpu_custom_call.1} parent=0
    #allocation2 [shape = 'u8[8192]{0}', space=vmem, size = 0x2000, scoped, tag = 'input window, operand 0, single buffered']
    #allocation3 [shape = 's32[1]{0}', space=sflag, size = 0x4, scoped, tag = 'scoped memory for tpu_custom_call.1']
    #allocation4 [shape = 's32[1]{0}', space=sflag, size = 0x4, scoped, tag = 'scoped memory for tpu_custom_call.1']
    #allocation5 [shape = 'u8[8192]{0}', space=vmem, size = 0x2000, scoped, tag = 'input window, operand 1, single buffered']
    #allocation6 [shape = 's32[1]{0}', space=sflag, size = 0x4, scoped, tag = 'scoped memory for tpu_custom_call.1']
    #allocation7 [shape = 'u8[16384]{0}', space=vmem, size = 0x4000, scoped, tag = 'input window, operand 2, single buffered']
    #allocation8 [shape = 'u8[8192]{0}', space=vmem, size = 0x2000, scoped, tag = 'output window, operand 0, single buffered']
    %9 = vsyncpa [#allocation3], 0
    %10 = vsyncpa [#allocation6], 0
    %11 = vsyncpa [#allocation4], 0
    // Predicated region
    $region2: #{tpu_custom_call.1} parent=1 // pred_check
      _
    $region3: #{tpu_custom_call.1} parent=1 // pred_check_branch
      %13 = sbr.rel (0) target = $region5
    $region4: #{tpu_custom_call.1} parent=1 // pred_region
      %s15 = ssub.s32 256, 256
      %16 = vsyncadd [#allocation3], %s15
      %s17 = sshll.u32 [#allocation2], 4
      %s18 = int_to_ptr.vmem [resolvable:$true] %s17
      %23 = dma.hbm_to_vmem [thread:$0]  %s0, 256, %s18, [#allocation3], 128, 128, 8
    $region5: #{tpu_custom_call.1} parent=1 // pred_fallthru
      _
    // Predicated region
    $region6: #{tpu_custom_call.1} parent=1 // pred_check
      _
    $region7: #{tpu_custom_call.1} parent=1 // pred_check_branch
      %25 = sbr.rel (0) target = $region9
    $region8: #{tpu_custom_call.1} parent=1 // pred_region
      %s27 = ssub.s32 256, 256
      %28 = vsyncadd [#allocation6], %s27
      %s29 = sshll.u32 [#allocation5], 4
      %s30 = int_to_ptr.vmem [resolvable:$true] %s29
      %35 = dma.hbm_to_vmem [thread:$0]  %s1, 256, %s30, [#allocation6], 128, 128, 8
    $region9: #{tpu_custom_call.1} parent=1 // pred_fallthru
      _
    // Predicated region
    $region10: #{tpu_custom_call.1} parent=1 // pred_check
      _
    $region11: #{tpu_custom_call.1} parent=1 // pred_check_branch
      %37 = sbr.rel (0) target = $region13
    $region12: #{tpu_custom_call.1} parent=1 // pred_region
      %s39 = ssub.s32 512, 512
      %40 = vsyncadd [#allocation6], %s39
      %s41 = sshll.u32 [#allocation7], 4
      %s42 = int_to_ptr.vmem [resolvable:$true] %s41
      %47 = dma.hbm_to_vmem [thread:$0]  %s2, 512, %s42, [#allocation6], 128, 128, 8
    $region13: #{tpu_custom_call.1} parent=1 // pred_fallthru
      _
    // Predicated region
    $region14: #{tpu_custom_call.1} parent=1 // pred_check
      _
    $region15: #{tpu_custom_call.1} parent=1 // pred_check_branch
      %49 = sbr.rel (0) target = $region17
    $region16: #{tpu_custom_call.1} parent=1 // pred_region
      _
    $region17: #{tpu_custom_call.1} parent=1 // pred_fallthru
      _
    // Predicated region
    $region18: #{tpu_custom_call.1} parent=1 // pred_check
      _
    $region19: #{tpu_custom_call.1} parent=1 // pred_check_branch
      %51 = sbr.rel (0) target = $region21
    $region20: #{tpu_custom_call.1} parent=1 // pred_region
      %52 = dma.done [#allocation3], 256
    $region21: #{tpu_custom_call.1} parent=1 // pred_fallthru
      _
    // Predicated region
    $region22: #{tpu_custom_call.1} parent=1 // pred_check
      _
    $region23: #{tpu_custom_call.1} parent=1 // pred_check_branch
      %54 = sbr.rel (0) target = $region25
    $region24: #{tpu_custom_call.1} parent=1 // pred_region
      %55 = dma.done [#allocation6], 256
    $region25: #{tpu_custom_call.1} parent=1 // pred_fallthru
      _
    // Predicated region
    $region26: #{tpu_custom_call.1} parent=1 // pred_check
      _
    $region27: #{tpu_custom_call.1} parent=1 // pred_check_branch
      %57 = sbr.rel (0) target = $region29
    $region28: #{tpu_custom_call.1} parent=1 // pred_region
      %58 = dma.done [#allocation6], 512
    $region29: #{tpu_custom_call.1} parent=1 // pred_fallthru
      _
    %v59 = vld [vmem:[#allocation2] sm:$0xff]
    %v60 = vld [vmem:[#allocation2 + $0x8] sm:$0xff]
    %v61 = vld [vmem:[#allocation5] sm:$0xff]
    %v62 = vld [vmem:[#allocation5 + $0x8] sm:$0xff]
    %vm63 = vcmask 64512
    %v65 = vsel %vm63, %v59, 0
    %67 = vmatprep.subr.mxu0 0.0
    %68 = vmatpush1.msra.mxu0 %v61
    %69 = vmatprep.subr.mxu0 0.0
    %70 = vmatpush1.msra.mxu0 0.0
    %71 = vmatprep.subr.mxu0 0.0
    %72 = vmatpush1.msra.mxu0 0.0
    %73 = vmatprep.subr.mxu0 0.0
    %74 = vmatpush1.msra.mxu0 0.0
    %75 = vmatprep.subr.mxu0 0.0
    %76 = vmatpush1.msra.mxu0 0.0
    %77 = vmatprep.subr.mxu0 0.0
    %78 = vmatpush1.msra.mxu0 0.0
    %79 = vmatprep.subr.mxu0 0.0
    %80 = vmatpush1.msra.mxu0 0.0
    %81 = vmatprep.subr.mxu0 0.0
    %82 = vmatpush1.msra.mxu0 0.0
    %83 = vmatprep.subr.mxu0 0.0
    %84 = vmatpush1.msra.mxu0 0.0
    %85 = vmatprep.subr.mxu0 0.0
    %86 = vmatpush1.msra.mxu0 0.0
    %87 = vmatprep.subr.mxu0 0.0
    %88 = vmatpush1.msra.mxu0 0.0
    %89 = vmatprep.subr.mxu0 0.0
    %90 = vmatpush1.msra.mxu0 0.0
    %91 = vmatprep.subr.mxu0 0.0
    %92 = vmatpush1.msra.mxu0 0.0
    %93 = vmatprep.subr.mxu0 0.0
    %94 = vmatpush1.msra.mxu0 0.0
    %95 = vmatprep.subr.mxu0 0.0
    %96 = vmatpush1.msra.mxu0 0.0
    %97 = vmatprep.subr.mxu0 0.0
    %98 = vmatpush1.msra.mxu0 0.0
    %99 = vmatprep.subr.mxu0 0.0
    %100 = vmatpush1.msra.mxu0 0.0
    %101 = vmatprep.subr.mxu0 0.0
    %102 = vmatpush1.msra.mxu0 0.0
    %103 = vmatprep.subr.mxu0 0.0
    %104 = vmatpush1.msra.mxu0 0.0
    %105 = vmatprep.subr.mxu0 0.0
    %106 = vmatpush1.msra.mxu0 0.0
    %107 = vmatprep.subr.mxu0 0.0
    %108 = vmatpush1.msra.mxu0 0.0
    %109 = vmatprep.subr.mxu0 0.0
    %110 = vmatpush1.msra.mxu0 0.0
    %111 = vmatprep.subr.mxu0 0.0
    %112 = vmatpush1.msra.mxu0 0.0
    %113 = vmatprep.subr.mxu0 0.0
    %114 = vmatpush1.msra.mxu0 0.0
    %115 = vmatprep.subr.mxu0 0.0
    %116 = vmatpush1.msra.mxu0 0.0
    %117 = vmatprep.subr.mxu0 0.0
    %118 = vmatpush1.msra.mxu0 0.0
    %119 = vmatprep.subr.mxu0 0.0
    %120 = vmatpush1.msra.mxu0 0.0
    %121 = vmatprep.subr.mxu0 0.0
    %122 = vmatpush1.msra.mxu0 0.0
    %123 = vmatprep.subr.mxu0 0.0
    %124 = vmatpush1.msra.mxu0 0.0
    %125 = vmatprep.subr.mxu0 0.0
    %126 = vmatpush1.msra.mxu0 0.0
    %127 = vmatprep.subr.mxu0 0.0
    %128 = vmatpush1.msra.mxu0 0.0
    %129 = vmatprep.subr.mxu0 0.0
    %130 = vmatpush1.msra.mxu0 0.0
    %131 = vmatprep.mubr.f32.mxu0 0.0
    %132 = vmatmul.mubr.f32.gmra.mrb[0].mxu0 %v65
    %v133 = vpop.f32.mrb[0].mxu0
    %v134 = vadd.f32 0.0, %v133
    %v135 = vpop.f32.mrb[0].mxu0
    %136 = vdwg.mxu0
    %v138 = vsel %vm63, %v60, 0
    %140 = vmatprep.subr.mxu0 0.0
    %141 = vmatpush1.msra.mxu0 %v62
    %142 = vmatprep.subr.mxu0 0.0
    %143 = vmatpush1.msra.mxu0 0.0
    %144 = vmatprep.subr.mxu0 0.0
    %145 = vmatpush1.msra.mxu0 0.0
    %146 = vmatprep.subr.mxu0 0.0
    %147 = vmatpush1.msra.mxu0 0.0
    %148 = vmatprep.subr.mxu0 0.0
    %149 = vmatpush1.msra.mxu0 0.0
    %150 = vmatprep.subr.mxu0 0.0
    %151 = vmatpush1.msra.mxu0 0.0
    %152 = vmatprep.subr.mxu0 0.0
    %153 = vmatpush1.msra.mxu0 0.0
    %154 = vmatprep.subr.mxu0 0.0
    %155 = vmatpush1.msra.mxu0 0.0
    %156 = vmatprep.subr.mxu0 0.0
    %157 = vmatpush1.msra.mxu0 0.0
    %158 = vmatprep.subr.mxu0 0.0
    %159 = vmatpush1.msra.mxu0 0.0
    %160 = vmatprep.subr.mxu0 0.0
    %161 = vmatpush1.msra.mxu0 0.0
    %162 = vmatprep.subr.mxu0 0.0
    %163 = vmatpush1.msra.mxu0 0.0
    %164 = vmatprep.subr.mxu0 0.0
    %165 = vmatpush1.msra.mxu0 0.0
    %166 = vmatprep.subr.mxu0 0.0
    %167 = vmatpush1.msra.mxu0 0.0
    %168 = vmatprep.subr.mxu0 0.0
    %169 = vmatpush1.msra.mxu0 0.0
    %170 = vmatprep.subr.mxu0 0.0
    %171 = vmatpush1.msra.mxu0 0.0
    %172 = vmatprep.subr.mxu0 0.0
    %173 = vmatpush1.msra.mxu0 0.0
    %174 = vmatprep.subr.mxu0 0.0
    %175 = vmatpush1.msra.mxu0 0.0
    %176 = vmatprep.subr.mxu0 0.0
    %177 = vmatpush1.msra.mxu0 0.0
    %178 = vmatprep.subr.mxu0 0.0
    %179 = vmatpush1.msra.mxu0 0.0
    %180 = vmatprep.subr.mxu0 0.0
    %181 = vmatpush1.msra.mxu0 0.0
    %182 = vmatprep.subr.mxu0 0.0
    %183 = vmatpush1.msra.mxu0 0.0
    %184 = vmatprep.subr.mxu0 0.0
    %185 = vmatpush1.msra.mxu0 0.0
    %186 = vmatprep.subr.mxu0 0.0
    %187 = vmatpush1.msra.mxu0 0.0
    %188 = vmatprep.subr.mxu0 0.0
    %189 = vmatpush1.msra.mxu0 0.0
    %190 = vmatprep.subr.mxu0 0.0
    %191 = vmatpush1.msra.mxu0 0.0
    %192 = vmatprep.subr.mxu0 0.0
    %193 = vmatpush1.msra.mxu0 0.0
    %194 = vmatprep.subr.mxu0 0.0
    %195 = vmatpush1.msra.mxu0 0.0
    %196 = vmatprep.subr.mxu0 0.0
    %197 = vmatpush1.msra.mxu0 0.0
    %198 = vmatprep.subr.mxu0 0.0
    %199 = vmatpush1.msra.mxu0 0.0
    %200 = vmatprep.subr.mxu0 0.0
    %201 = vmatpush1.msra.mxu0 0.0
    %202 = vmatprep.subr.mxu0 0.0
    %203 = vmatpush1.msra.mxu0 0.0
    %204 = vmatprep.mubr.f32.mxu0 0.0
    %205 = vmatmul.mubr.f32.gmra.mrb[0].mxu0 %v138
    %v206 = vpop.f32.mrb[0].mxu0
    %v207 = vadd.f32 0.0, %v206
    %v208 = vpop.f32.mrb[0].mxu0
    %209 = vdwg.mxu0
    %v210 = vld [vmem:[#allocation7] sm:$0xff]
    %v211 = vld [vmem:[#allocation7 + $0x8] sm:$0xff]
    %v212 = vld [vmem:[#allocation7 + $0x10] sm:$0xff]
    %v213 = vld [vmem:[#allocation7 + $0x18] sm:$0xff]
    %vm214 = vcmask 261120
    %v216 = vsel %vm214, %v134, 0
    %v219 = vsel %vm214, %v207, 0
    %221 = vmatprep.subr.mxu0 0.0
    %222 = vmatpush1.msra.mxu0 %v210
    %223 = vmatprep.subr.mxu0 0.0
    %224 = vmatpush1.msra.mxu0 %v211
    %225 = vmatprep.subr.mxu0 0.0
    %226 = vmatpush1.msra.mxu0 %v212
    %227 = vmatprep.subr.mxu0 0.0
    %228 = vmatpush1.msra.mxu0 %v213
    %229 = vmatprep.subr.mxu0 0.0
    %230 = vmatpush1.msra.mxu0 0.0
    %231 = vmatprep.subr.mxu0 0.0
    %232 = vmatpush1.msra.mxu0 0.0
    %233 = vmatprep.subr.mxu0 0.0
    %234 = vmatpush1.msra.mxu0 0.0
    %235 = vmatprep.subr.mxu0 0.0
    %236 = vmatpush1.msra.mxu0 0.0
    %237 = vmatprep.subr.mxu0 0.0
    %238 = vmatpush1.msra.mxu0 0.0
    %239 = vmatprep.subr.mxu0 0.0
    %240 = vmatpush1.msra.mxu0 0.0
    %241 = vmatprep.subr.mxu0 0.0
    %242 = vmatpush1.msra.mxu0 0.0
    %243 = vmatprep.subr.mxu0 0.0
    %244 = vmatpush1.msra.mxu0 0.0
    %245 = vmatprep.subr.mxu0 0.0
    %246 = vmatpush1.msra.mxu0 0.0
    %247 = vmatprep.subr.mxu0 0.0
    %248 = vmatpush1.msra.mxu0 0.0
    %249 = vmatprep.subr.mxu0 0.0
    %250 = vmatpush1.msra.mxu0 0.0
    %251 = vmatprep.subr.mxu0 0.0
    %252 = vmatpush1.msra.mxu0 0.0
    %253 = vmatprep.subr.mxu0 0.0
    %254 = vmatpush1.msra.mxu0 0.0
    %255 = vmatprep.subr.mxu0 0.0
    %256 = vmatpush1.msra.mxu0 0.0
    %257 = vmatprep.subr.mxu0 0.0
    %258 = vmatpush1.msra.mxu0 0.0
    %259 = vmatprep.subr.mxu0 0.0
    %260 = vmatpush1.msra.mxu0 0.0
    %261 = vmatprep.subr.mxu0 0.0
    %262 = vmatpush1.msra.mxu0 0.0
    %263 = vmatprep.subr.mxu0 0.0
    %264 = vmatpush1.msra.mxu0 0.0
    %265 = vmatprep.subr.mxu0 0.0
    %266 = vmatpush1.msra.mxu0 0.0
    %267 = vmatprep.subr.mxu0 0.0
    %268 = vmatpush1.msra.mxu0 0.0
    %269 = vmatprep.subr.mxu0 0.0
    %270 = vmatpush1.msra.mxu0 0.0
    %271 = vmatprep.subr.mxu0 0.0
    %272 = vmatpush1.msra.mxu0 0.0
    %273 = vmatprep.subr.mxu0 0.0
    %274 = vmatpush1.msra.mxu0 0.0
    %275 = vmatprep.subr.mxu0 0.0
    %276 = vmatpush1.msra.mxu0 0.0
    %277 = vmatprep.subr.mxu0 0.0
    %278 = vmatpush1.msra.mxu0 0.0
    %279 = vmatprep.subr.mxu0 0.0
    %280 = vmatpush1.msra.mxu0 0.0
    %281 = vmatprep.subr.mxu0 0.0
    %282 = vmatpush1.msra.mxu0 0.0
    %283 = vmatprep.subr.mxu0 0.0
    %284 = vmatpush1.msra.mxu0 0.0
    %285 = vmatprep.mubr.f32.mxu0 0.0
    %286 = vmatmul.mubr.f32.gmra.mrb[0].mxu0 %v216
    %v287 = vpop.f32.mrb[0].mxu0
    %v288 = vadd.f32 0.0, %v287
    %v289 = vpop.f32.mrb[0].mxu0
    %290 = vmatprep.mubr.f32.mxu0 0.0
    %291 = vmatmul.mubr.f32.gmra.mrb[0].mxu0 %v219
    %v292 = vpop.f32.mrb[0].mxu0
    %v293 = vadd.f32 0.0, %v292
    %v294 = vpop.f32.mrb[0].mxu0
    %295 = vdwg.mxu0
    %v296 = vld [vmem:[%s3] sm:$0x1]
    %v298 = vlaneseq
    %v299 = vshrl.u32 %v298, 7
    %v300 = vsub.s32 0, %v299
    %v301 = vrot.slane %v296, %v300
    %v303 = vadd.f32 %v288, %v301
    %v304 = vadd.f32 %v293, %v301
    %305 = vst [vmem:[#allocation8] sm:$0xff] %v303
    %306 = vst [vmem:[#allocation8 + $0x8] sm:$0xff] %v304
    // Predicated region
    $region30: #{tpu_custom_call.1} parent=1 // pred_check
      _
    $region31: #{tpu_custom_call.1} parent=1 // pred_check_branch
      %308 = sbr.rel (0) target = $region33
    $region32: #{tpu_custom_call.1} parent=1 // pred_region
      %s310 = ssub.s32 256, 256
      %311 = vsyncadd [#allocation4], %s310
      %s312 = sshll.u32 [#allocation8], 4
      %s313 = int_to_ptr.vmem [resolvable:$true] %s312
      %318 = dma.vmem_to_hbm [thread:$0]  %s313, 256, %s4, [#allocation4], 128, 128, 8
    $region33: #{tpu_custom_call.1} parent=1 // pred_fallthru
      _
    // Predicated region
    $region34: #{tpu_custom_call.1} parent=1 // pred_check
      _
    $region35: #{tpu_custom_call.1} parent=1 // pred_check_branch
      %320 = sbr.rel (0) target = $region37
    $region36: #{tpu_custom_call.1} parent=1 // pred_region
      %321 = dma.done [#allocation4], 256
    $region37: #{tpu_custom_call.1} parent=1 // pred_fallthru
      _
    %322 = vsyncpa [#allocation3], 1
    %323 = vsyncpa [#allocation6], 1
    %324 = vsyncpa [#allocation4], 1

</llo_original>
